<compile_context>
chip_gen: v5e
topology: v5e:2x2
jax: 0.10.0
libtpu: 0.0.40
codegen_flags: <defaults>
</compile_context>

<pallas_src>
import jax
import jax.numpy as jnp
from jax.experimental import pallas as pl
from jax.experimental.pallas import tpu as pltpu

STATE_DIM = 4        # CartPole observation dim
ACTION_DIM = 2       # CartPole action dim
HIDDEN = 64
WIDTH = 2 * HIDDEN   # fused lane width (actor lanes 0:64, critic lanes 64:128)
BATCH = 8            # multiple of 8 (f32 sublane); larger B amortizes overhead

# Row layout of the packed parameter slab (all offsets sublane-aligned, /8):
W1_ROW = 0                    # rows 0:8    (first STATE_DIM rows real, rest 0)
W2_ROW = 8                    # rows 8:136  block-diagonal (128, 128)
W3_ROW = W2_ROW + WIDTH       # rows 136:264 packed output projection
B_ROW = W3_ROW + WIDTH        # rows 264:272 (row 0 = b1, row 1 = b2, row 2 = b3)
TOTAL_ROWS = B_ROW + 8        # 272


def actor_critic_fused_kernel(x_ref, slab_ref, out_ref):
    x = x_ref[...]                                            # (B, STATE_DIM) f32

    w1 = slab_ref[W1_ROW:W1_ROW + STATE_DIM, :]               # (4,   128)
    w2 = slab_ref[W2_ROW:W2_ROW + WIDTH, :]                   # (128, 128)
    w3 = slab_ref[W3_ROW:W3_ROW + WIDTH, :]                   # (128, 128)
    b = slab_ref[B_ROW:B_ROW + 8, :]                          # (8,   128)
    b1 = b[0:1, :]
    b2 = b[1:2, :]
    b3 = b[2:3, :]

    # Fused actor+critic 3-layer MLP: x -> tanh -> tanh -> linear, 128 lanes.
    h1 = jnp.tanh(jnp.dot(x, w1, preferred_element_type=jnp.float32) + b1)
    h2 = jnp.tanh(jnp.dot(h1, w2, preferred_element_type=jnp.float32) + b2)
    out_ref[...] = jnp.dot(h2, w3, preferred_element_type=jnp.float32) + b3


def actor_critic_forward(x, slab):
    """x: (B, STATE_DIM) f32.  slab: (TOTAL_ROWS, WIDTH) packed params.

    Returns (logits (B, ACTION_DIM), value (B, 1)) — same semantics as the
    PyTorch ActorCritic.forward."""
    B = x.shape[0]
    vmem = pl.BlockSpec(memory_space=pltpu.MemorySpace.VMEM)
    out = pl.pallas_call(
        actor_critic_fused_kernel,
        out_shape=jax.ShapeDtypeStruct((B, WIDTH), jnp.float32),
        in_specs=[vmem, vmem],
        out_specs=vmem,
    )(x, slab)
    logits = out[:, :ACTION_DIM]
    value = out[:, ACTION_DIM:ACTION_DIM + 1]
    return logits, value


def init_params(key):
    """PyTorch-Linear-style init: U(-1/sqrt(fan_in), 1/sqrt(fan_in)).

    Weights stored transposed relative to torch, i.e. (in, out)."""
    def linear(key, fan_in, fan_out):
        kw, kb = jax.random.split(key)
        bound = 1.0 / jnp.sqrt(jnp.float32(fan_in))
        w = jax.random.uniform(kw, (fan_in, fan_out), jnp.float32, -bound, bound)
        b = jax.random.uniform(kb, (1, fan_out), jnp.float32, -bound, bound)
        return w, b

    keys = jax.random.split(key, 6)
    aw1, ab1 = linear(keys[0], STATE_DIM, HIDDEN)
    aw2, ab2 = linear(keys[1], HIDDEN, HIDDEN)
    aw3, ab3 = linear(keys[2], HIDDEN, ACTION_DIM)
    cw1, cb1 = linear(keys[3], STATE_DIM, HIDDEN)
    cw2, cb2 = linear(keys[4], HIDDEN, HIDDEN)
    cw3, cb3 = linear(keys[5], HIDDEN, 1)
    return dict(aw1=aw1, ab1=ab1, aw2=aw2, ab2=ab2, aw3=aw3, ab3=ab3,
                cw1=cw1, cb1=cb1, cw2=cw2, cb2=cb2, cw3=cw3, cb3=cb3)


def pack_params(p):
    """Pack actor+critic params into one (TOTAL_ROWS, WIDTH) f32 slab.

    Off-diagonal / unused entries are exactly zero so actor and critic
    activations cannot cross-contaminate in the fused matmuls."""
    slab = jnp.zeros((TOTAL_ROWS, WIDTH), jnp.float32)

    # Layer 1: [aw1 | cw1]  -> (STATE_DIM, 128)
    w1 = jnp.concatenate([p["aw1"], p["cw1"]], axis=1)
    slab = slab.at[W1_ROW:W1_ROW + STATE_DIM, :].set(w1)

    # Layer 2: block-diagonal (128, 128)
    slab = slab.at[W2_ROW:W2_ROW + HIDDEN, :HIDDEN].set(p["aw2"])
    slab = slab.at[W2_ROW + HIDDEN:W2_ROW + WIDTH, HIDDEN:].set(p["cw2"])

    # Layer 3: actor rows -> lanes 0:ACTION_DIM, critic rows -> lane ACTION_DIM
    slab = slab.at[W3_ROW:W3_ROW + HIDDEN, :ACTION_DIM].set(p["aw3"])
    slab = slab.at[W3_ROW + HIDDEN:W3_ROW + WIDTH,
                   ACTION_DIM:ACTION_DIM + 1].set(p["cw3"])

    # Biases: row 0 = b1, row 1 = b2, row 2 = b3 (packed like the outputs)
    b1 = jnp.concatenate([p["ab1"], p["cb1"]], axis=1)
    b2 = jnp.concatenate([p["ab2"], p["cb2"]], axis=1)
    slab = slab.at[B_ROW + 0, :].set(b1[0])
    slab = slab.at[B_ROW + 1, :].set(b2[0])
    slab = slab.at[B_ROW + 2, :ACTION_DIM].set(p["ab3"][0])
    slab = slab.at[B_ROW + 2, ACTION_DIM:ACTION_DIM + 1].set(p["cb3"][0])
    return slab


def reference_forward(x, p):
    def mlp3(x, w1, b1, w2, b2, w3, b3):
        h1 = jnp.tanh(x @ w1 + b1)
        h2 = jnp.tanh(h1 @ w2 + b2)
        return h2 @ w3 + b3
    logits = mlp3(x, p["aw1"], p["ab1"], p["aw2"], p["ab2"], p["aw3"], p["ab3"])
    value = mlp3(x, p["cw1"], p["cb1"], p["cw2"], p["cb2"], p["cw3"], p["cb3"])
    return logits, value


if __name__ == "__main__":
    key = jax.random.PRNGKey(0)
    k_params, k_x = jax.random.split(key)
    params = init_params(k_params)
    slab = pack_params(params)                       # pack ONCE, reuse per call
    x = jax.random.normal(k_x, (BATCH, STATE_DIM), jnp.float32)

    fwd = jax.jit(actor_critic_forward)
    logits, value = fwd(x, slab)
    jax.block_until_ready((logits, value))

    ref_logits, ref_value = reference_forward(x, params)
    assert logits.shape == (BATCH, ACTION_DIM)
    assert value.shape == (BATCH, 1)
    assert jnp.allclose(logits, ref_logits, atol=1e-5, rtol=1e-5)
    assert jnp.allclose(value, ref_value, atol=1e-5, rtol=1e-5)

    print("KERNEL_OK")
</pallas_src>

<mosaic_0001>
module attributes {stable_mosaic.version = 11 : i64} {
  func.func @actor_critic_fused_kernel(%arg0: memref<8x4xf32, #tpu.memory_space<vmem>>, %arg1: memref<272x128xf32, #tpu.memory_space<vmem>>, %arg2: memref<8x128xf32, #tpu.memory_space<vmem>>) attributes {dimension_semantics = [], scalar_prefetch = 0 : i64, scratch_operands = 0 : i64, tpu.core_type = #tpu.core_type<tc>} {
    %c0 = arith.constant 0 : index
    %c0_0 = arith.constant 0 : index
    %0 = vector.load %arg0[%c0, %c0_0] : memref<8x4xf32, #tpu.memory_space<vmem>>, vector<8x4xf32>
    %c0_1 = arith.constant 0 : index
    %c0_2 = arith.constant 0 : index
    %1 = vector.load %arg1[%c0_1, %c0_2] : memref<272x128xf32, #tpu.memory_space<vmem>>, vector<4x128xf32>
    %c8 = arith.constant 8 : index
    %c0_3 = arith.constant 0 : index
    %2 = vector.load %arg1[%c8, %c0_3] : memref<272x128xf32, #tpu.memory_space<vmem>>, vector<128x128xf32>
    %c136 = arith.constant 136 : index
    %c0_4 = arith.constant 0 : index
    %3 = vector.load %arg1[%c136, %c0_4] : memref<272x128xf32, #tpu.memory_space<vmem>>, vector<128x128xf32>
    %c264 = arith.constant 264 : index
    %c0_5 = arith.constant 0 : index
    %4 = vector.load %arg1[%c264, %c0_5] : memref<272x128xf32, #tpu.memory_space<vmem>>, vector<8x128xf32>
    %5 = vector.extract_strided_slice %4 {offsets = [0, 0], sizes = [1, 128], strides = [1, 1]} : vector<8x128xf32> to vector<1x128xf32>
    %6 = vector.extract_strided_slice %4 {offsets = [1, 0], sizes = [1, 128], strides = [1, 1]} : vector<8x128xf32> to vector<1x128xf32>
    %7 = vector.extract_strided_slice %4 {offsets = [2, 0], sizes = [1, 128], strides = [1, 1]} : vector<8x128xf32> to vector<1x128xf32>
    %cst = arith.constant dense<0.000000e+00> : vector<8x128xf32>
    %8 = tpu.matmul %0, %1, %cst {dimension_numbers = #tpu.dot_dimension_numbers<[1], [0], [0], [1], [0, 0, 1, 1], [], []>} : vector<8x4xf32>, vector<4x128xf32>, vector<8x128xf32> -> vector<8x128xf32>
    %9 = vector.broadcast %5 : vector<1x128xf32> to vector<8x128xf32>
    %10 = arith.addf %8, %9 : vector<8x128xf32>
    %11 = math.tanh %10 : vector<8x128xf32>
    %cst_6 = arith.constant dense<0.000000e+00> : vector<8x128xf32>
    %12 = tpu.matmul %11, %2, %cst_6 {dimension_numbers = #tpu.dot_dimension_numbers<[1], [0], [0], [1], [0, 0, 1, 1], [], []>} : vector<8x128xf32>, vector<128x128xf32>, vector<8x128xf32> -> vector<8x128xf32>
    %13 = vector.broadcast %6 : vector<1x128xf32> to vector<8x128xf32>
    %14 = arith.addf %12, %13 : vector<8x128xf32>
    %15 = math.tanh %14 : vector<8x128xf32>
    %cst_7 = arith.constant dense<0.000000e+00> : vector<8x128xf32>
    %16 = tpu.matmul %15, %3, %cst_7 {dimension_numbers = #tpu.dot_dimension_numbers<[1], [0], [0], [1], [0, 0, 1, 1], [], []>} : vector<8x128xf32>, vector<128x128xf32>, vector<8x128xf32> -> vector<8x128xf32>
    %17 = vector.broadcast %7 : vector<1x128xf32> to vector<8x128xf32>
    %18 = arith.addf %16, %17 : vector<8x128xf32>
    %c0_8 = arith.constant 0 : index
    %c0_9 = arith.constant 0 : index
    %19 = vector.load %arg2[%c0_8, %c0_9] : memref<8x128xf32, #tpu.memory_space<vmem>>, vector<8x128xf32>
    tpu.vector_store %arg2[%c0_8, %c0_9], %18 {strides = array<i32>} : memref<8x128xf32, #tpu.memory_space<vmem>>, vector<8x128xf32>,
    return
  }
}

</mosaic_0001>

<llo_original>
// kernel: actor_critic_forward.1
$region0: #{actor_critic_forward.1}
  #allocation0 [shape = 'u32[]', space=smem, size = 0x4, offset = 0x4, fixed_abs, tag = 'smem constant byte address 0x4 - core index']
  #allocation1 [shape = 'u32[72,128]{1,0:T(1,128)}', space=vmem, size = 0x9000, scoped, tag = 'internal scratch']
  %s0 = inlined_call_operand.vmem [shape: f32[8,4], index: 0, kind: input, shape index: {}]
  %s1 = inlined_call_operand.hbm [shape: f32[272,128], index: 1, kind: input, shape index: {}]
  %s2 = inlined_call_operand.vmem [shape: f32[8,128], index: 2, kind: output, shape index: {}]
  %s3 = sld [smem:[#allocation0]]
  $region22: #{actor_critic_forward.1} parent=0
    _
  %s5 = ssub.s32 1, %s3
  %s6 = scalar_select 0, %s5, %s3
  $region1: #{actor_critic_forward.1} parent=0
    #allocation2 [shape = 'u8[139264]{0}', space=vmem, size = 0x22000, scoped, tag = 'input window, operand 1, single buffered']
    #allocation3 [shape = 's32[1]{0}', space=sflag, size = 0x4, scoped, tag = 'scoped memory for actor_critic_forward.1']
    %7 = vsyncpa [#allocation3], 0
    // Predicated region
    $region2: #{actor_critic_forward.1} parent=1 // pred_check
      _
    $region3: #{actor_critic_forward.1} parent=1 // pred_check_branch
      %9 = sbr.rel (0) target = $region5
    $region4: #{actor_critic_forward.1} parent=1 // pred_region
      _
    $region5: #{actor_critic_forward.1} parent=1 // pred_fallthru
      _
    // Predicated region
    $region6: #{actor_critic_forward.1} parent=1 // pred_check
      _
    $region7: #{actor_critic_forward.1} parent=1 // pred_check_branch
      %11 = sbr.rel (0) target = $region9
    $region8: #{actor_critic_forward.1} parent=1 // pred_region
      %13 = vsyncadd [#allocation3], 0
      %s14 = sshll.u32 %s1, 4
      %s15 = int_to_ptr.hbm [resolvable:$true] %s14
      %s16 = sshll.u32 [#allocation2], 4
      %s17 = int_to_ptr.vmem [resolvable:$true] %s16
      %22 = dma.hbm_to_vmem [thread:$0]  %s15, 4352, %s17, [#allocation3], 128, 128, 8
    $region9: #{actor_critic_forward.1} parent=1 // pred_fallthru
      _
    // Predicated region
    $region10: #{actor_critic_forward.1} parent=1 // pred_check
      _
    $region11: #{actor_critic_forward.1} parent=1 // pred_check_branch
      %24 = sbr.rel (0) target = $region13
    $region12: #{actor_critic_forward.1} parent=1 // pred_region
      %26 = dma.done [#allocation3], 4352
    $region13: #{actor_critic_forward.1} parent=1 // pred_fallthru
      _
    %v27 = vld [vmem:[%s0] sm:$0xff]
    %v28 = vld [vmem:[#allocation2] sm:$0xf]
    %v29 = vld [vmem:[#allocation2 + $0x8] sm:$0xff]
    %v30 = vld [vmem:[#allocation2 + $0x10] sm:$0xff]
    %v31 = vld [vmem:[#allocation2 + $0x18] sm:$0xff]
    %v32 = vld [vmem:[#allocation2 + $0x20] sm:$0xff]
    %v33 = vld [vmem:[#allocation2 + $0x28] sm:$0xff]
    %v34 = vld [vmem:[#allocation2 + $0x30] sm:$0xff]
    %v35 = vld [vmem:[#allocation2 + $0x38] sm:$0xff]
    %v36 = vld [vmem:[#allocation2 + $0x40] sm:$0xff]
    %v37 = vld [vmem:[#allocation2 + $0x48] sm:$0xff]
    %v38 = vld [vmem:[#allocation2 + $0x50] sm:$0xff]
    %v39 = vld [vmem:[#allocation2 + $0x58] sm:$0xff]
    %v40 = vld [vmem:[#allocation2 + $0x60] sm:$0xff]
    %v41 = vld [vmem:[#allocation2 + $0x68] sm:$0xff]
    %v42 = vld [vmem:[#allocation2 + $0x70] sm:$0xff]
    %v43 = vld [vmem:[#allocation2 + $0x78] sm:$0xff]
    %v44 = vld [vmem:[#allocation2 + $0x80] sm:$0xff]
    %v45 = vld [vmem:[#allocation2 + $0x88] sm:$0xff]
    %v46 = vld [vmem:[#allocation2 + $0x90] sm:$0xff]
    %v47 = vld [vmem:[#allocation2 + $0x98] sm:$0xff]
    %v48 = vld [vmem:[#allocation2 + $0xa0] sm:$0xff]
    %v49 = vld [vmem:[#allocation2 + $0xa8] sm:$0xff]
    %v50 = vld [vmem:[#allocation2 + $0xb0] sm:$0xff]
    %v51 = vld [vmem:[#allocation2 + $0xb8] sm:$0xff]
    %v52 = vld [vmem:[#allocation2 + $0xc0] sm:$0xff]
    %v53 = vld [vmem:[#allocation2 + $0xc8] sm:$0xff]
    %v54 = vld [vmem:[#allocation2 + $0xd0] sm:$0xff]
    %v55 = vld [vmem:[#allocation2 + $0xd8] sm:$0xff]
    %v56 = vld [vmem:[#allocation2 + $0xe0] sm:$0xff]
    %v57 = vld [vmem:[#allocation2 + $0xe8] sm:$0xff]
    %v58 = vld [vmem:[#allocation2 + $0xf0] sm:$0xff]
    %v59 = vld [vmem:[#allocation2 + $0xf8] sm:$0xff]
    %v60 = vld [vmem:[#allocation2 + $0x100] sm:$0xff]
    %v61 = vld [vmem:[#allocation2 + $0x108] sm:$0xff]
    %v62 = vperm.slane %v61, 0
    %vm63 = vcmask 31744
    %v65 = vsel %vm63, %v27, 0
    %vm67 = vcmask 1043456
    %v69 = vsel %vm67, %v28, 0
    %71 = vmatpush.msra.mxu0 0.0
    %72 = vmatpush.msra.mxu0 0.0
    %73 = vmatpush.msra.mxu0 0.0
    %74 = vmatpush.msra.mxu0 0.0
    %75 = vmatpush.msra.mxu0 0.0
    %76 = vmatpush.msra.mxu0 0.0
    %77 = vmatpush.msra.mxu0 0.0
    %78 = vmatpush.msra.mxu0 0.0
    %79 = vmatpush.msra.mxu0 0.0
    %80 = vmatpush.msra.mxu0 0.0
    %81 = vmatpush.msra.mxu0 0.0
    %82 = vmatpush.msra.mxu0 0.0
    %83 = vmatpush.msra.mxu0 0.0
    %84 = vmatpush.msra.mxu0 0.0
    %85 = vmatpush.msra.mxu0 0.0
    %86 = vmatpush.msra.mxu0 %v69
    %87 = vmatmul.f32.gmra.mxu0 %v65
    %v88 = vpop.f32.mrf.mxu0
    %v89 = vadd.f32 %v62, %v88
    %90 = vdwg.mxu0
    %v91 = vtanh.pop %v89
    %v92 = vperm.slane %v61, 1
    %93 = vmatpush.msra.mxu0 %v44
    %94 = vmatpush.msra.mxu0 %v43
    %95 = vmatpush.msra.mxu0 %v42
    %96 = vmatpush.msra.mxu0 %v41
    %97 = vmatpush.msra.mxu0 %v40
    %98 = vmatpush.msra.mxu0 %v39
    %99 = vmatpush.msra.mxu0 %v38
    %100 = vmatpush.msra.mxu0 %v37
    %101 = vmatpush.msra.mxu0 %v36
    %102 = vmatpush.msra.mxu0 %v35
    %103 = vmatpush.msra.mxu0 %v34
    %104 = vmatpush.msra.mxu0 %v33
    %105 = vmatpush.msra.mxu0 %v32
    %106 = vmatpush.msra.mxu0 %v31
    %107 = vmatpush.msra.mxu0 %v30
    %108 = vmatpush.msra.mxu0 %v29
    %109 = vmatmul.f32.gmra.mxu0 %v91
    %v110 = vpop.f32.mrf.mxu0
    %v111 = vadd.f32 %v92, %v110
    %112 = vdwg.mxu0
    %v113 = vtanh.pop %v111
    %v114 = vperm.slane %v61, 2
    %115 = vmatpush.msra.mxu0 %v60
    %116 = vmatpush.msra.mxu0 %v59
    %117 = vmatpush.msra.mxu0 %v58
    %118 = vmatpush.msra.mxu0 %v57
    %119 = vmatpush.msra.mxu0 %v56
    %120 = vmatpush.msra.mxu0 %v55
    %121 = vmatpush.msra.mxu0 %v54
    %122 = vmatpush.msra.mxu0 %v53
    %123 = vmatpush.msra.mxu0 %v52
    %124 = vmatpush.msra.mxu0 %v51
    %125 = vmatpush.msra.mxu0 %v50
    %126 = vmatpush.msra.mxu0 %v49
    %127 = vmatpush.msra.mxu0 %v48
    %128 = vmatpush.msra.mxu0 %v47
    %129 = vmatpush.msra.mxu0 %v46
    %130 = vmatpush.msra.mxu0 %v45
    %131 = vmatmul.f32.gmra.mxu0 %v113
    %v132 = vpop.f32.mrf.mxu0
    %v133 = vadd.f32 %v114, %v132
    %134 = vdwg.mxu0
    %135 = vst [vmem:[%s2] sm:$0xff] %v133
    // Predicated region
    $region14: #{actor_critic_forward.1} parent=1 // pred_check
      _
    $region15: #{actor_critic_forward.1} parent=1 // pred_check_branch
      %137 = sbr.rel (0) target = $region17
    $region16: #{actor_critic_forward.1} parent=1 // pred_region
      _
    $region17: #{actor_critic_forward.1} parent=1 // pred_fallthru
      _
    // Predicated region
    $region18: #{actor_critic_forward.1} parent=1 // pred_check
      _
    $region19: #{actor_critic_forward.1} parent=1 // pred_check_branch
      %139 = sbr.rel (0) target = $region21
    $region20: #{actor_critic_forward.1} parent=1 // pred_region
      _
    $region21: #{actor_critic_forward.1} parent=1 // pred_fallthru
      _
    %140 = vsyncpa [#allocation3], 1

</llo_original>
